<compile_context>
chip_gen: v5e
topology: v5e:2x2
jax: 0.10.0
libtpu: 0.0.40
codegen_flags: <defaults>
</compile_context>

<pallas_src>
import jax
import jax.numpy as jnp
from jax.experimental import pallas as pl
from jax.experimental.pallas import tpu as pltpu


def _round_up(x, m):
    return ((x + m - 1) // m) * m


def _cdiv(a, b):
    return -(-a // b)


def _sublane(dtype):
    # Sublane pack of one vreg: 8 rows for 32-bit, 16 for bf16, 32 for int8/fp8.
    return max(8, 32 // jnp.dtype(dtype).itemsize)


def _vmem_capacity_bytes():
    try:
        return int(pltpu.get_tpu_info().vmem_capacity_bytes)
    except Exception:
        return 64 << 20  # conservative (v7x-sized) default


def _const_spec(shape, index_map, single_buffer=True):
    # Invariant operands (constant index_map): single-buffer them so Mosaic
    # does not waste VMEM double-buffering data that never changes.
    if single_buffer:
        try:
            return pl.BlockSpec(shape, index_map, pipeline_mode=pl.Buffered(1))
        except (TypeError, AttributeError):
            pass
    return pl.BlockSpec(shape, index_map)


def _mlp_kernel_resident(x_ref, w1_ref, b1_ref, w2_ref, b2_ref, o_ref):
    # fc1: (TM,K)@(K,H)+b1 -> ReLU -> fc2: (TM,H)@(H,N)+b2
    h = jnp.dot(x_ref[...], w1_ref[...], preferred_element_type=jnp.float32)
    h = jnp.maximum(h + b1_ref[...].astype(jnp.float32), 0.0)
    o = jnp.dot(h.astype(w2_ref.dtype), w2_ref[...],
                preferred_element_type=jnp.float32)
    o_ref[...] = (o + b2_ref[...].astype(jnp.float32)).astype(o_ref.dtype)


def _mlp_kernel_htiled(x_ref, w1_ref, b1_ref, w2_ref, b2_ref, o_ref, acc_ref):
    # Hidden dim is a reduction grid axis: accumulate fc2 partial products.
    hi = pl.program_id(1)

    @pl.when(hi == 0)
    def _():
        acc_ref[...] = jnp.zeros_like(acc_ref)

    hc = jnp.dot(x_ref[...], w1_ref[...], preferred_element_type=jnp.float32)
    hc = jnp.maximum(hc + b1_ref[...].astype(jnp.float32), 0.0)
    acc_ref[...] += jnp.dot(hc.astype(w2_ref.dtype), w2_ref[...],
                            preferred_element_type=jnp.float32)

    @pl.when(hi == pl.num_programs(1) - 1)
    def _():
        o_ref[...] = (acc_ref[...]
                      + b2_ref[...].astype(jnp.float32)).astype(o_ref.dtype)


def make_mlp_forward(w1, b1, w2, b2, *, tm_max=512, th=512,
                     force_htiled=False, single_buffer_weights=True):
    """Pads the parameters once and returns a jitted forward(x) closure."""
    K, H = w1.shape
    N = w2.shape[1]
    dtype = w1.dtype
    itemsize = jnp.dtype(dtype).itemsize
    sub = _sublane(dtype)
    lane = 256 if itemsize < 4 else 128  # 256-align bf16/int8 for v6e/v7x MXU

    Kp = _round_up(K, lane)
    Hp = _round_up(H, lane)
    Np = _round_up(N, lane)

    b1 = jnp.reshape(b1, (1, H))
    b2 = jnp.reshape(b2, (1, N))
    # Pad once at init.  b1 MUST be zero-padded so padded hidden columns stay
    # ReLU(0)=0 and padded W2 rows contribute nothing.
    w1p = jnp.pad(w1, ((0, Kp - K), (0, Hp - H)))
    b1p = jnp.pad(b1, ((0, 0), (0, Hp - H)))
    w2p = jnp.pad(w2, ((0, Hp - H), (0, Np - N)))
    b2p = jnp.pad(b2, ((0, 0), (0, Np - N)))

    cap = _vmem_capacity_bytes()
    budget = int(0.85 * cap)          # planning target
    vmem_limit = int(min(0.90 * cap, 128 << 20))

    weight_bytes = (Kp * Hp + Hp + Hp * Np + Np) * itemsize
    use_htiled = force_htiled or (weight_bytes > budget // 2)

    # Hidden tile for the fallback plan (multiple of the lane alignment).
    TH = min(Hp, _round_up(th, lane))
    while use_htiled and TH > lane and \
            2 * (Kp * TH + TH + TH * Np) * itemsize > budget // 2:
        TH -= lane

    def _pick_tm(B, fixed_bytes, per_row_bytes):
        avail = max(budget - fixed_bytes, per_row_bytes)
        tm_cap = max((min(tm_max, avail // per_row_bytes) // sub) * sub, sub)
        min_steps = 2 if B > sub else 1     # >=2 steps: overlap + 2 TCs on v7x
        steps = max(_cdiv(B, tm_cap), min_steps)
        tm = _round_up(_cdiv(B, steps), sub)
        return min(tm, tm_cap)

    @jax.jit
    def forward(x):
        B = x.shape[0]
        assert x.shape[1] == K, "input feature size mismatch"

        if use_htiled:
            fixed = (2 * (Kp * TH + TH + TH * Np) + Np) * itemsize
            per_row = (2 * Kp + 2 * Np) * itemsize + Np * 4 + TH * (4 + itemsize)
        else:
            fixed = weight_bytes
            per_row = 2 * (Kp + Np) * itemsize + Hp * (4 + itemsize)
        TM = _pick_tm(B, fixed, per_row)
        Bp = _round_up(B, TM)

        # Only x is padded per call (weights were padded at init).
        xp = jnp.pad(x, ((0, Bp - B), (0, Kp - K)))

        cost = pl.CostEstimate(
            flops=2 * Bp * (Kp * Hp + Hp * Np),
            transcendentals=0,
            bytes_accessed=(Bp * Kp + Kp * Hp + Hp + Hp * Np + Np + Bp * Np)
            * itemsize,
        )

        if not use_htiled:
            out_p = pl.pallas_call(
                _mlp_kernel_resident,
                out_shape=jax.ShapeDtypeStruct((Bp, Np), x.dtype),
                grid=(Bp // TM,),
                in_specs=[
                    pl.BlockSpec((TM, Kp), lambda i: (i, 0)),
                    _const_spec((Kp, Hp), lambda i: (0, 0), single_buffer_weights),
                    _const_spec((1, Hp), lambda i: (0, 0), single_buffer_weights),
                    _const_spec((Hp, Np), lambda i: (0, 0), single_buffer_weights),
                    _const_spec((1, Np), lambda i: (0, 0), single_buffer_weights),
                ],
                out_specs=pl.BlockSpec((TM, Np), lambda i: (i, 0)),
                compiler_params=pltpu.CompilerParams(
                    dimension_semantics=("parallel",),
                    vmem_limit_bytes=vmem_limit,
                ),
                cost_estimate=cost,
            )(xp, w1p, b1p, w2p, b2p)
        else:
            out_p = pl.pallas_call(
                _mlp_kernel_htiled,
                out_shape=jax.ShapeDtypeStruct((Bp, Np), x.dtype),
                grid=(Bp // TM, Hp // TH),
                in_specs=[
                    pl.BlockSpec((TM, Kp), lambda i, h: (i, 0)),
                    pl.BlockSpec((Kp, TH), lambda i, h: (0, h)),
                    pl.BlockSpec((1, TH), lambda i, h: (0, h)),
                    pl.BlockSpec((TH, Np), lambda i, h: (h, 0)),
                    _const_spec((1, Np), lambda i, h: (0, 0), single_buffer_weights),
                ],
                out_specs=pl.BlockSpec((TM, Np), lambda i, h: (i, 0)),
                scratch_shapes=[pltpu.VMEM((TM, Np), jnp.float32)],
                compiler_params=pltpu.CompilerParams(
                    dimension_semantics=("parallel", "arbitrary"),
                    vmem_limit_bytes=vmem_limit,
                ),
                cost_estimate=cost,
            )(xp, w1p, b1p, w2p, b2p)

        return out_p[:B, :N]

    return forward


def init_params(key, input_size, hidden_size, output_size, dtype=jnp.float32):
    # Deterministic init mimicking PyTorch nn.Linear default:
    # U(-1/sqrt(fan_in), 1/sqrt(fan_in)).
    k1, k2, k3, k4 = jax.random.split(key, 4)
    lim1 = 1.0 / jnp.sqrt(jnp.array(input_size, dtype))
    lim2 = 1.0 / jnp.sqrt(jnp.array(hidden_size, dtype))
    w1 = jax.random.uniform(k1, (input_size, hidden_size), dtype, -lim1, lim1)
    b1 = jax.random.uniform(k2, (1, hidden_size), dtype, -lim1, lim1)
    w2 = jax.random.uniform(k3, (hidden_size, output_size), dtype, -lim2, lim2)
    b2 = jax.random.uniform(k4, (1, output_size), dtype, -lim2, lim2)
    return w1, b1, w2, b2


def _run_forward(x, params, **kw):
    # Try the single-buffered-weights plan first; fall back to default
    # buffering if this jax build rejects pipeline_mode=Buffered(1).
    try:
        fwd = make_mlp_forward(*params, **kw)
        return jax.block_until_ready(fwd(x))
    except Exception:
        fwd = make_mlp_forward(*params, single_buffer_weights=False, **kw)
        return jax.block_until_ready(fwd(x))


if __name__ == "__main__":
    # --- Small config matching the module spec (weight-resident plan) ---
    input_size, hidden_size, output_size = 16, 32, 8
    batch = 4

    key = jax.random.PRNGKey(0)
    kx, kp, kx2, kp2 = jax.random.split(key, 4)
    x = jax.random.normal(kx, (batch, input_size), jnp.float32)
    params = init_params(kp, input_size, hidden_size, output_size)
    w1, b1, w2, b2 = params

    out = _run_forward(x, params)
    ref = jnp.maximum(x @ w1 + b1, 0.0) @ w2 + b2
    assert out.shape == (batch, output_size)
    assert jnp.allclose(out, ref, atol=1e-5, rtol=1e-5)

    # --- Exercise the hidden-tiled fallback plan (accumulator path) ---
    in2, hid2, out2_sz, batch2 = 128, 256, 128, 32
    x2 = jax.random.normal(kx2, (batch2, in2), jnp.float32)
    params2 = init_params(kp2, in2, hid2, out2_sz)
    w1b, b1b, w2b, b2b = params2

    out2 = _run_forward(x2, params2, th=128, force_htiled=True)
    ref2 = jnp.maximum(jnp.dot(x2, w1b, precision="highest") + b1b, 0.0)
    ref2 = jnp.dot(ref2, w2b, precision="highest") + b2b
    assert out2.shape == (batch2, out2_sz)
    assert jnp.allclose(out2, ref2, atol=5e-3, rtol=5e-3)

    print("KERNEL_OK")
</pallas_src>

<mosaic_0001>
module attributes {stable_mosaic.version = 11 : i64} {
  func.func @_mlp_kernel_resident(%arg0: i32, %arg1: memref<8x128xf32, #tpu.memory_space<vmem>>, %arg2: memref<128x128xf32, #tpu.memory_space<vmem>>, %arg3: memref<1x128xf32, #tpu.memory_space<vmem>>, %arg4: memref<128x128xf32, #tpu.memory_space<vmem>>, %arg5: memref<1x128xf32, #tpu.memory_space<vmem>>, %arg6: memref<8x128xf32, #tpu.memory_space<vmem>>) attributes {dimension_semantics = [#tpu.dimension_semantics<parallel>], iteration_bounds = array<i64: 1>, scalar_prefetch = 0 : i64, scratch_operands = 0 : i64, tpu.core_type = #tpu.core_type<tc>, window_params = [{transform_indices = @transform_0, window_bounds = array<i64: 8, 128>}, {pipeline_mode = #tpu.pipeline_mode<synchronous>, transform_indices = @transform_1, window_bounds = array<i64: 128, 128>}, {pipeline_mode = #tpu.pipeline_mode<synchronous>, transform_indices = @transform_2, window_bounds = array<i64: 1, 128>}, {pipeline_mode = #tpu.pipeline_mode<synchronous>, transform_indices = @transform_3, window_bounds = array<i64: 128, 128>}, {pipeline_mode = #tpu.pipeline_mode<synchronous>, transform_indices = @transform_4, window_bounds = array<i64: 1, 128>}, {transform_indices = @transform_5, window_bounds = array<i64: 8, 128>}]} {
    %c0 = arith.constant 0 : index
    %c0_0 = arith.constant 0 : index
    %0 = vector.load %arg1[%c0, %c0_0] : memref<8x128xf32, #tpu.memory_space<vmem>>, vector<8x128xf32>
    %c0_1 = arith.constant 0 : index
    %c0_2 = arith.constant 0 : index
    %1 = vector.load %arg2[%c0_1, %c0_2] : memref<128x128xf32, #tpu.memory_space<vmem>>, vector<128x128xf32>
    %cst = arith.constant dense<0.000000e+00> : vector<8x128xf32>
    %2 = tpu.matmul %0, %1, %cst {dimension_numbers = #tpu.dot_dimension_numbers<[1], [0], [0], [1], [0, 0, 1, 1], [], []>} : vector<8x128xf32>, vector<128x128xf32>, vector<8x128xf32> -> vector<8x128xf32>
    %c0_3 = arith.constant 0 : index
    %c0_4 = arith.constant 0 : index
    %3 = vector.load %arg3[%c0_3, %c0_4] : memref<1x128xf32, #tpu.memory_space<vmem>>, vector<1x128xf32>
    %4 = vector.broadcast %3 : vector<1x128xf32> to vector<8x128xf32>
    %5 = arith.addf %2, %4 : vector<8x128xf32>
    %cst_5 = arith.constant 0.000000e+00 : f32
    %6 = vector.broadcast %cst_5 : f32 to vector<8x128xf32>
    %7 = arith.maximumf %5, %6 : vector<8x128xf32>
    %c0_6 = arith.constant 0 : index
    %c0_7 = arith.constant 0 : index
    %8 = vector.load %arg4[%c0_6, %c0_7] : memref<128x128xf32, #tpu.memory_space<vmem>>, vector<128x128xf32>
    %cst_8 = arith.constant dense<0.000000e+00> : vector<8x128xf32>
    %9 = tpu.matmul %7, %8, %cst_8 {dimension_numbers = #tpu.dot_dimension_numbers<[1], [0], [0], [1], [0, 0, 1, 1], [], []>} : vector<8x128xf32>, vector<128x128xf32>, vector<8x128xf32> -> vector<8x128xf32>
    %c0_9 = arith.constant 0 : index
    %c0_10 = arith.constant 0 : index
    %10 = vector.load %arg5[%c0_9, %c0_10] : memref<1x128xf32, #tpu.memory_space<vmem>>, vector<1x128xf32>
    %11 = vector.broadcast %10 : vector<1x128xf32> to vector<8x128xf32>
    %12 = arith.addf %9, %11 : vector<8x128xf32>
    %c0_11 = arith.constant 0 : index
    %c0_12 = arith.constant 0 : index
    %13 = vector.load %arg6[%c0_11, %c0_12] : memref<8x128xf32, #tpu.memory_space<vmem>>, vector<8x128xf32>
    tpu.vector_store %arg6[%c0_11, %c0_12], %12 {strides = array<i32>} : memref<8x128xf32, #tpu.memory_space<vmem>>, vector<8x128xf32>,
    return
  }
  func.func @transform_0(%arg0: i32) -> (i32, i32) {
    %c0_i32 = arith.constant 0 : i32
    %c0_i32_0 = arith.constant 0 : i32
    return %arg0, %c0_i32 : i32, i32
  }
  func.func @transform_1(%arg0: i32) -> (i32, i32) {
    %c0_i32 = arith.constant 0 : i32
    %c0_i32_0 = arith.constant 0 : i32
    %c0_i32_1 = arith.constant 0 : i32
    return %c0_i32, %c0_i32_0 : i32, i32
  }
  func.func @transform_2(%arg0: i32) -> (i32, i32) {
    %c0_i32 = arith.constant 0 : i32
    %c0_i32_0 = arith.constant 0 : i32
    %c0_i32_1 = arith.constant 0 : i32
    return %c0_i32, %c0_i32_0 : i32, i32
  }
  func.func @transform_3(%arg0: i32) -> (i32, i32) {
    %c0_i32 = arith.constant 0 : i32
    %c0_i32_0 = arith.constant 0 : i32
    %c0_i32_1 = arith.constant 0 : i32
    return %c0_i32, %c0_i32_0 : i32, i32
  }
  func.func @transform_4(%arg0: i32) -> (i32, i32) {
    %c0_i32 = arith.constant 0 : i32
    %c0_i32_0 = arith.constant 0 : i32
    %c0_i32_1 = arith.constant 0 : i32
    return %c0_i32, %c0_i32_0 : i32, i32
  }
  func.func @transform_5(%arg0: i32) -> (i32, i32) {
    %c0_i32 = arith.constant 0 : i32
    %c0_i32_0 = arith.constant 0 : i32
    return %arg0, %c0_i32 : i32, i32
  }
}

module attributes {stable_mosaic.version = 11 : i64} {
  func.func @_mlp_kernel_resident(%arg0: i32, %arg1: memref<8x128xf32, #tpu.memory_space<vmem>>, %arg2: memref<128x128xf32, #tpu.memory_space<vmem>>, %arg3: memref<1x128xf32, #tpu.memory_space<vmem>>, %arg4: memref<128x128xf32, #tpu.memory_space<vmem>>, %arg5: memref<1x128xf32, #tpu.memory_space<vmem>>, %arg6: memref<8x128xf32, #tpu.memory_space<vmem>>) attributes {dimension_semantics = [#tpu.dimension_semantics<parallel>], iteration_bounds = array<i64: 1>, scalar_prefetch = 0 : i64, scratch_operands = 0 : i64, tpu.core_type = #tpu.core_type<tc>, window_params = [{transform_indices = @transform_0, window_bounds = array<i64: 8, 128>}, {pipeline_mode = #tpu.pipeline_mode<synchronous>, transform_indices = @transform_1, window_bounds = array<i64: 128, 128>}, {pipeline_mode = #tpu.pipeline_mode<synchronous>, transform_indices = @transform_2, window_bounds = array<i64: 1, 128>}, {pipeline_mode = #tpu.pipeline_mode<synchronous>, transform_indices = @transform_3, window_bounds = array<i64: 128, 128>}, {pipeline_mode = #tpu.pipeline_mode<synchronous>, transform_indices = @transform_4, window_bounds = array<i64: 1, 128>}, {transform_indices = @transform_5, window_bounds = array<i64: 8, 128>}]} {
    %c0 = arith.constant 0 : index
    %c0_0 = arith.constant 0 : index
    %0 = vector.load %arg1[%c0, %c0_0] : memref<8x128xf32, #tpu.memory_space<vmem>>, vector<8x128xf32>
    %c0_1 = arith.constant 0 : index
    %c0_2 = arith.constant 0 : index
    %1 = vector.load %arg2[%c0_1, %c0_2] : memref<128x128xf32, #tpu.memory_space<vmem>>, vector<128x128xf32>
    %cst = arith.constant dense<0.000000e+00> : vector<8x128xf32>
    %2 = tpu.matmul %0, %1, %cst {dimension_numbers = #tpu.dot_dimension_numbers<[1], [0], [0], [1], [0, 0, 1, 1], [], []>} : vector<8x128xf32>, vector<128x128xf32>, vector<8x128xf32> -> vector<8x128xf32>
    %c0_3 = arith.constant 0 : index
    %c0_4 = arith.constant 0 : index
    %3 = vector.load %arg3[%c0_3, %c0_4] : memref<1x128xf32, #tpu.memory_space<vmem>>, vector<1x128xf32>
    %4 = vector.broadcast %3 : vector<1x128xf32> to vector<8x128xf32>
    %5 = arith.addf %2, %4 : vector<8x128xf32>
    %cst_5 = arith.constant 0.000000e+00 : f32
    %6 = vector.broadcast %cst_5 : f32 to vector<8x128xf32>
    %7 = arith.maximumf %5, %6 : vector<8x128xf32>
    %c0_6 = arith.constant 0 : index
    %c0_7 = arith.constant 0 : index
    %8 = vector.load %arg4[%c0_6, %c0_7] : memref<128x128xf32, #tpu.memory_space<vmem>>, vector<128x128xf32>
    %cst_8 = arith.constant dense<0.000000e+00> : vector<8x128xf32>
    %9 = tpu.matmul %7, %8, %cst_8 {dimension_numbers = #tpu.dot_dimension_numbers<[1], [0], [0], [1], [0, 0, 1, 1], [], []>} : vector<8x128xf32>, vector<128x128xf32>, vector<8x128xf32> -> vector<8x128xf32>
    %c0_9 = arith.constant 0 : index
    %c0_10 = arith.constant 0 : index
    %10 = vector.load %arg5[%c0_9, %c0_10] : memref<1x128xf32, #tpu.memory_space<vmem>>, vector<1x128xf32>
    %11 = vector.broadcast %10 : vector<1x128xf32> to vector<8x128xf32>
    %12 = arith.addf %9, %11 : vector<8x128xf32>
    %c0_11 = arith.constant 0 : index
    %c0_12 = arith.constant 0 : index
    %13 = vector.load %arg6[%c0_11, %c0_12] : memref<8x128xf32, #tpu.memory_space<vmem>>, vector<8x128xf32>
    tpu.vector_store %arg6[%c0_11, %c0_12], %12 {strides = array<i32>} : memref<8x128xf32, #tpu.memory_space<vmem>>, vector<8x128xf32>,
    return
  }
  func.func @transform_0(%arg0: i32) -> (i32, i32) {
    %c0_i32 = arith.constant 0 : i32
    %c0_i32_0 = arith.constant 0 : i32
    return %arg0, %c0_i32 : i32, i32
  }
  func.func @transform_1(%arg0: i32) -> (i32, i32) {
    %c0_i32 = arith.constant 0 : i32
    %c0_i32_0 = arith.constant 0 : i32
    %c0_i32_1 = arith.constant 0 : i32
    return %c0_i32, %c0_i32_0 : i32, i32
  }
  func.func @transform_2(%arg0: i32) -> (i32, i32) {
    %c0_i32 = arith.constant 0 : i32
    %c0_i32_0 = arith.constant 0 : i32
    %c0_i32_1 = arith.constant 0 : i32
    return %c0_i32, %c0_i32_0 : i32, i32
  }
  func.func @transform_3(%arg0: i32) -> (i32, i32) {
    %c0_i32 = arith.constant 0 : i32
    %c0_i32_0 = arith.constant 0 : i32
    %c0_i32_1 = arith.constant 0 : i32
    return %c0_i32, %c0_i32_0 : i32, i32
  }
  func.func @transform_4(%arg0: i32) -> (i32, i32) {
    %c0_i32 = arith.constant 0 : i32
    %c0_i32_0 = arith.constant 0 : i32
    %c0_i32_1 = arith.constant 0 : i32
    return %c0_i32, %c0_i32_0 : i32, i32
  }
  func.func @transform_5(%arg0: i32) -> (i32, i32) {
    %c0_i32 = arith.constant 0 : i32
    %c0_i32_0 = arith.constant 0 : i32
    return %arg0, %c0_i32 : i32, i32
  }
}

</mosaic_0001>

<llo_original>
// kernel: forward.1
$region0: #{forward.1}
  #allocation0 [shape = 'u32[]', space=smem, size = 0x4, offset = 0x4, fixed_abs, tag = 'smem constant byte address 0x4 - core index']
  #allocation1 [shape = 'u32[72,128]{1,0:T(1,128)}', space=vmem, size = 0x9000, scoped, tag = 'internal scratch']
  %s0 = inlined_call_operand.vmem [shape: f32[8,128], index: 0, kind: input, shape index: {}]
  %s1 = inlined_call_operand.hbm [shape: f32[128,128], index: 1, kind: input, shape index: {}]
  %s2 = inlined_call_operand.vmem [shape: f32[1,128], index: 2, kind: input, shape index: {}]
  %s3 = inlined_call_operand.hbm [shape: f32[128,128], index: 3, kind: input, shape index: {}]
  %s4 = inlined_call_operand.vmem [shape: f32[1,128], index: 4, kind: input, shape index: {}]
  %s5 = inlined_call_operand.vmem [shape: f32[8,128], index: 5, kind: output, shape index: {}]
  %s6 = sld [smem:[#allocation0]]
  $region38: #{forward.1} parent=0
    _
  %s8 = ssub.s32 1, %s6
  %s9 = scalar_select 0, %s8, %s6
  $region1: #{forward.1} parent=0
    #allocation2 [shape = 'u8[65536]{0}', space=vmem, size = 0x10000, scoped, tag = 'input window, operand 1, single buffered']
    #allocation3 [shape = 's32[1]{0}', space=sflag, size = 0x4, scoped, tag = 'scoped memory for forward.1']
    #allocation4 [shape = 'u8[65536]{0}', space=vmem, size = 0x10000, scoped, tag = 'input window, operand 3, single buffered']
    #allocation5 [shape = 's32[1]{0}', space=sflag, size = 0x4, scoped, tag = 'scoped memory for forward.1']
    %10 = vsyncpa [#allocation3], 0
    %11 = vsyncpa [#allocation5], 0
    // Predicated region
    $region2: #{forward.1} parent=1 // pred_check
      _
    $region3: #{forward.1} parent=1 // pred_check_branch
      %13 = sbr.rel (0) target = $region5
    $region4: #{forward.1} parent=1 // pred_region
      _
    $region5: #{forward.1} parent=1 // pred_fallthru
      _
    // Predicated region
    $region6: #{forward.1} parent=1 // pred_check
      _
    $region7: #{forward.1} parent=1 // pred_check_branch
      %15 = sbr.rel (0) target = $region9
    $region8: #{forward.1} parent=1 // pred_region
      %17 = vsyncadd [#allocation3], 0
      %s18 = sshll.u32 %s1, 4
      %s19 = int_to_ptr.hbm [resolvable:$true] %s18
      %s20 = sshll.u32 [#allocation2], 4
      %s21 = int_to_ptr.vmem [resolvable:$true] %s20
      %26 = dma.hbm_to_vmem [thread:$0]  %s19, 2048, %s21, [#allocation3], 128, 128, 8
    $region9: #{forward.1} parent=1 // pred_fallthru
      _
    // Predicated region
    $region10: #{forward.1} parent=1 // pred_check
      _
    $region11: #{forward.1} parent=1 // pred_check_branch
      %28 = sbr.rel (0) target = $region13
    $region12: #{forward.1} parent=1 // pred_region
      _
    $region13: #{forward.1} parent=1 // pred_fallthru
      _
    // Predicated region
    $region14: #{forward.1} parent=1 // pred_check
      _
    $region15: #{forward.1} parent=1 // pred_check_branch
      %30 = sbr.rel (0) target = $region17
    $region16: #{forward.1} parent=1 // pred_region
      %32 = vsyncadd [#allocation5], 0
      %s33 = sshll.u32 %s3, 4
      %s34 = int_to_ptr.hbm [resolvable:$true] %s33
      %s35 = sshll.u32 [#allocation4], 4
      %s36 = int_to_ptr.vmem [resolvable:$true] %s35
      %41 = dma.hbm_to_vmem [thread:$0]  %s34, 2048, %s36, [#allocation5], 128, 128, 8
    $region17: #{forward.1} parent=1 // pred_fallthru
      _
    // Predicated region
    $region18: #{forward.1} parent=1 // pred_check
      _
    $region19: #{forward.1} parent=1 // pred_check_branch
      %43 = sbr.rel (0) target = $region21
    $region20: #{forward.1} parent=1 // pred_region
      _
    $region21: #{forward.1} parent=1 // pred_fallthru
      _
    // Predicated region
    $region22: #{forward.1} parent=1 // pred_check
      _
    $region23: #{forward.1} parent=1 // pred_check_branch
      %45 = sbr.rel (0) target = $region25
    $region24: #{forward.1} parent=1 // pred_region
      %47 = dma.done [#allocation3], 2048
    $region25: #{forward.1} parent=1 // pred_fallthru
      _
    // Predicated region
    $region26: #{forward.1} parent=1 // pred_check
      _
    $region27: #{forward.1} parent=1 // pred_check_branch
      %49 = sbr.rel (0) target = $region29
    $region28: #{forward.1} parent=1 // pred_region
      %51 = dma.done [#allocation5], 2048
    $region29: #{forward.1} parent=1 // pred_fallthru
      _
    %v52 = vld [vmem:[%s0] sm:$0xff]
    %v53 = vld [vmem:[#allocation2] sm:$0xff]
    %v54 = vld [vmem:[#allocation2 + $0x8] sm:$0xff]
    %v55 = vld [vmem:[#allocation2 + $0x10] sm:$0xff]
    %v56 = vld [vmem:[#allocation2 + $0x18] sm:$0xff]
    %v57 = vld [vmem:[#allocation2 + $0x20] sm:$0xff]
    %v58 = vld [vmem:[#allocation2 + $0x28] sm:$0xff]
    %v59 = vld [vmem:[#allocation2 + $0x30] sm:$0xff]
    %v60 = vld [vmem:[#allocation2 + $0x38] sm:$0xff]
    %v61 = vld [vmem:[#allocation2 + $0x40] sm:$0xff]
    %v62 = vld [vmem:[#allocation2 + $0x48] sm:$0xff]
    %v63 = vld [vmem:[#allocation2 + $0x50] sm:$0xff]
    %v64 = vld [vmem:[#allocation2 + $0x58] sm:$0xff]
    %v65 = vld [vmem:[#allocation2 + $0x60] sm:$0xff]
    %v66 = vld [vmem:[#allocation2 + $0x68] sm:$0xff]
    %v67 = vld [vmem:[#allocation2 + $0x70] sm:$0xff]
    %v68 = vld [vmem:[#allocation2 + $0x78] sm:$0xff]
    %v69 = vld [vmem:[%s2] sm:$0x1]
    %v71 = vperm.slane %v69, 0
    %73 = vmatpush.msra.mxu0 %v68
    %74 = vmatpush.msra.mxu0 %v67
    %75 = vmatpush.msra.mxu0 %v66
    %76 = vmatpush.msra.mxu0 %v65
    %77 = vmatpush.msra.mxu0 %v64
    %78 = vmatpush.msra.mxu0 %v63
    %79 = vmatpush.msra.mxu0 %v62
    %80 = vmatpush.msra.mxu0 %v61
    %81 = vmatpush.msra.mxu0 %v60
    %82 = vmatpush.msra.mxu0 %v59
    %83 = vmatpush.msra.mxu0 %v58
    %84 = vmatpush.msra.mxu0 %v57
    %85 = vmatpush.msra.mxu0 %v56
    %86 = vmatpush.msra.mxu0 %v55
    %87 = vmatpush.msra.mxu0 %v54
    %88 = vmatpush.msra.mxu0 %v53
    %89 = vmatmul.f32.gmra.mxu0 %v52
    %v90 = vpop.f32.mrf.mxu0
    %v91 = vadd.f32 %v71, %v90
    %92 = vdwg.mxu0
    %v93 = vmax.f32 %v91, 0.0
    %v94 = vld [vmem:[#allocation4] sm:$0xff]
    %v95 = vld [vmem:[#allocation4 + $0x8] sm:$0xff]
    %v96 = vld [vmem:[#allocation4 + $0x10] sm:$0xff]
    %v97 = vld [vmem:[#allocation4 + $0x18] sm:$0xff]
    %v98 = vld [vmem:[#allocation4 + $0x20] sm:$0xff]
    %v99 = vld [vmem:[#allocation4 + $0x28] sm:$0xff]
    %v100 = vld [vmem:[#allocation4 + $0x30] sm:$0xff]
    %v101 = vld [vmem:[#allocation4 + $0x38] sm:$0xff]
    %v102 = vld [vmem:[#allocation4 + $0x40] sm:$0xff]
    %v103 = vld [vmem:[#allocation4 + $0x48] sm:$0xff]
    %v104 = vld [vmem:[#allocation4 + $0x50] sm:$0xff]
    %v105 = vld [vmem:[#allocation4 + $0x58] sm:$0xff]
    %v106 = vld [vmem:[#allocation4 + $0x60] sm:$0xff]
    %v107 = vld [vmem:[#allocation4 + $0x68] sm:$0xff]
    %v108 = vld [vmem:[#allocation4 + $0x70] sm:$0xff]
    %v109 = vld [vmem:[#allocation4 + $0x78] sm:$0xff]
    %v110 = vld [vmem:[%s4] sm:$0x1]
    %v112 = vperm.slane %v110, 0
    %114 = vmatpush.msra.mxu0 %v109
    %115 = vmatpush.msra.mxu0 %v108
    %116 = vmatpush.msra.mxu0 %v107
    %117 = vmatpush.msra.mxu0 %v106
    %118 = vmatpush.msra.mxu0 %v105
    %119 = vmatpush.msra.mxu0 %v104
    %120 = vmatpush.msra.mxu0 %v103
    %121 = vmatpush.msra.mxu0 %v102
    %122 = vmatpush.msra.mxu0 %v101
    %123 = vmatpush.msra.mxu0 %v100
    %124 = vmatpush.msra.mxu0 %v99
    %125 = vmatpush.msra.mxu0 %v98
    %126 = vmatpush.msra.mxu0 %v97
    %127 = vmatpush.msra.mxu0 %v96
    %128 = vmatpush.msra.mxu0 %v95
    %129 = vmatpush.msra.mxu0 %v94
    %130 = vmatmul.f32.gmra.mxu0 %v93
    %v131 = vpop.f32.mrf.mxu0
    %v132 = vadd.f32 %v112, %v131
    %133 = vdwg.mxu0
    %134 = vst [vmem:[%s5] sm:$0xff] %v132
    // Predicated region
    $region30: #{forward.1} parent=1 // pred_check
      _
    $region31: #{forward.1} parent=1 // pred_check_branch
      %136 = sbr.rel (0) target = $region33
    $region32: #{forward.1} parent=1 // pred_region
      _
    $region33: #{forward.1} parent=1 // pred_fallthru
      _
    // Predicated region
    $region34: #{forward.1} parent=1 // pred_check
      _
    $region35: #{forward.1} parent=1 // pred_check_branch
      %138 = sbr.rel (0) target = $region37
    $region36: #{forward.1} parent=1 // pred_region
      _
    $region37: #{forward.1} parent=1 // pred_fallthru
      _
    %139 = vsyncpa [#allocation3], 1
    %140 = vsyncpa [#allocation5], 1

// kernel: forward.1
$region0: #{forward.1}
  #allocation0 [shape = 'u32[]', space=smem, size = 0x4, offset = 0x4, fixed_abs, tag = 'smem constant byte address 0x4 - core index']
  #allocation1 [shape = 'u32[72,128]{1,0:T(1,128)}', space=vmem, size = 0x9000, scoped, tag = 'internal scratch']
  %s0 = inlined_call_operand.vmem [shape: f32[8,128], index: 0, kind: input, shape index: {}]
  %s1 = inlined_call_operand.hbm [shape: f32[128,128], index: 1, kind: input, shape index: {}]
  %s2 = inlined_call_operand.vmem [shape: f32[1,128], index: 2, kind: input, shape index: {}]
  %s3 = inlined_call_operand.hbm [shape: f32[128,128], index: 3, kind: input, shape index: {}]
  %s4 = inlined_call_operand.vmem [shape: f32[1,128], index: 4, kind: input, shape index: {}]
  %s5 = inlined_call_operand.vmem [shape: f32[8,128], index: 5, kind: output, shape index: {}]
  %s6 = sld [smem:[#allocation0]]
  $region38: #{forward.1} parent=0
    _
  %s8 = ssub.s32 1, %s6
  %s9 = scalar_select 0, %s8, %s6
  $region1: #{forward.1} parent=0
    #allocation2 [shape = 'u8[65536]{0}', space=vmem, size = 0x10000, scoped, tag = 'input window, operand 1, single buffered']
    #allocation3 [shape = 's32[1]{0}', space=sflag, size = 0x4, scoped, tag = 'scoped memory for forward.1']
    #allocation4 [shape = 'u8[65536]{0}', space=vmem, size = 0x10000, scoped, tag = 'input window, operand 3, single buffered']
    #allocation5 [shape = 's32[1]{0}', space=sflag, size = 0x4, scoped, tag = 'scoped memory for forward.1']
    %10 = vsyncpa [#allocation3], 0
    %11 = vsyncpa [#allocation5], 0
    // Predicated region
    $region2: #{forward.1} parent=1 // pred_check
      _
    $region3: #{forward.1} parent=1 // pred_check_branch
      %13 = sbr.rel (0) target = $region5
    $region4: #{forward.1} parent=1 // pred_region
      _
    $region5: #{forward.1} parent=1 // pred_fallthru
      _
    // Predicated region
    $region6: #{forward.1} parent=1 // pred_check
      _
    $region7: #{forward.1} parent=1 // pred_check_branch
      %15 = sbr.rel (0) target = $region9
    $region8: #{forward.1} parent=1 // pred_region
      %17 = vsyncadd [#allocation3], 0
      %s18 = sshll.u32 %s1, 4
      %s19 = int_to_ptr.hbm [resolvable:$true] %s18
      %s20 = sshll.u32 [#allocation2], 4
      %s21 = int_to_ptr.vmem [resolvable:$true] %s20
      %26 = dma.hbm_to_vmem [thread:$0]  %s19, 2048, %s21, [#allocation3], 128, 128, 8
    $region9: #{forward.1} parent=1 // pred_fallthru
      _
    // Predicated region
    $region10: #{forward.1} parent=1 // pred_check
      _
    $region11: #{forward.1} parent=1 // pred_check_branch
      %28 = sbr.rel (0) target = $region13
    $region12: #{forward.1} parent=1 // pred_region
      _
    $region13: #{forward.1} parent=1 // pred_fallthru
      _
    // Predicated region
    $region14: #{forward.1} parent=1 // pred_check
      _
    $region15: #{forward.1} parent=1 // pred_check_branch
      %30 = sbr.rel (0) target = $region17
    $region16: #{forward.1} parent=1 // pred_region
      %32 = vsyncadd [#allocation5], 0
      %s33 = sshll.u32 %s3, 4
      %s34 = int_to_ptr.hbm [resolvable:$true] %s33
      %s35 = sshll.u32 [#allocation4], 4
      %s36 = int_to_ptr.vmem [resolvable:$true] %s35
      %41 = dma.hbm_to_vmem [thread:$0]  %s34, 2048, %s36, [#allocation5], 128, 128, 8
    $region17: #{forward.1} parent=1 // pred_fallthru
      _
    // Predicated region
    $region18: #{forward.1} parent=1 // pred_check
      _
    $region19: #{forward.1} parent=1 // pred_check_branch
      %43 = sbr.rel (0) target = $region21
    $region20: #{forward.1} parent=1 // pred_region
      _
    $region21: #{forward.1} parent=1 // pred_fallthru
      _
    // Predicated region
    $region22: #{forward.1} parent=1 // pred_check
      _
    $region23: #{forward.1} parent=1 // pred_check_branch
      %45 = sbr.rel (0) target = $region25
    $region24: #{forward.1} parent=1 // pred_region
      %47 = dma.done [#allocation3], 2048
    $region25: #{forward.1} parent=1 // pred_fallthru
      _
    // Predicated region
    $region26: #{forward.1} parent=1 // pred_check
      _
    $region27: #{forward.1} parent=1 // pred_check_branch
      %49 = sbr.rel (0) target = $region29
    $region28: #{forward.1} parent=1 // pred_region
      %51 = dma.done [#allocation5], 2048
    $region29: #{forward.1} parent=1 // pred_fallthru
      _
    %v52 = vld [vmem:[%s0] sm:$0xff]
    %v53 = vld [vmem:[#allocation2] sm:$0xff]
    %v54 = vld [vmem:[#allocation2 + $0x8] sm:$0xff]
    %v55 = vld [vmem:[#allocation2 + $0x10] sm:$0xff]
    %v56 = vld [vmem:[#allocation2 + $0x18] sm:$0xff]
    %v57 = vld [vmem:[#allocation2 + $0x20] sm:$0xff]
    %v58 = vld [vmem:[#allocation2 + $0x28] sm:$0xff]
    %v59 = vld [vmem:[#allocation2 + $0x30] sm:$0xff]
    %v60 = vld [vmem:[#allocation2 + $0x38] sm:$0xff]
    %v61 = vld [vmem:[#allocation2 + $0x40] sm:$0xff]
    %v62 = vld [vmem:[#allocation2 + $0x48] sm:$0xff]
    %v63 = vld [vmem:[#allocation2 + $0x50] sm:$0xff]
    %v64 = vld [vmem:[#allocation2 + $0x58] sm:$0xff]
    %v65 = vld [vmem:[#allocation2 + $0x60] sm:$0xff]
    %v66 = vld [vmem:[#allocation2 + $0x68] sm:$0xff]
    %v67 = vld [vmem:[#allocation2 + $0x70] sm:$0xff]
    %v68 = vld [vmem:[#allocation2 + $0x78] sm:$0xff]
    %v69 = vld [vmem:[%s2] sm:$0x1]
    %v71 = vperm.slane %v69, 0
    %73 = vmatpush.msra.mxu0 %v68
    %74 = vmatpush.msra.mxu0 %v67
    %75 = vmatpush.msra.mxu0 %v66
    %76 = vmatpush.msra.mxu0 %v65
    %77 = vmatpush.msra.mxu0 %v64
    %78 = vmatpush.msra.mxu0 %v63
    %79 = vmatpush.msra.mxu0 %v62
    %80 = vmatpush.msra.mxu0 %v61
    %81 = vmatpush.msra.mxu0 %v60
    %82 = vmatpush.msra.mxu0 %v59
    %83 = vmatpush.msra.mxu0 %v58
    %84 = vmatpush.msra.mxu0 %v57
    %85 = vmatpush.msra.mxu0 %v56
    %86 = vmatpush.msra.mxu0 %v55
    %87 = vmatpush.msra.mxu0 %v54
    %88 = vmatpush.msra.mxu0 %v53
    %89 = vmatmul.f32.gmra.mxu0 %v52
    %v90 = vpop.f32.mrf.mxu0
    %v91 = vadd.f32 %v71, %v90
    %92 = vdwg.mxu0
    %v93 = vmax.f32 %v91, 0.0
    %v94 = vld [vmem:[#allocation4] sm:$0xff]
    %v95 = vld [vmem:[#allocation4 + $0x8] sm:$0xff]
    %v96 = vld [vmem:[#allocation4 + $0x10] sm:$0xff]
    %v97 = vld [vmem:[#allocation4 + $0x18] sm:$0xff]
    %v98 = vld [vmem:[#allocation4 + $0x20] sm:$0xff]
    %v99 = vld [vmem:[#allocation4 + $0x28] sm:$0xff]
    %v100 = vld [vmem:[#allocation4 + $0x30] sm:$0xff]
    %v101 = vld [vmem:[#allocation4 + $0x38] sm:$0xff]
    %v102 = vld [vmem:[#allocation4 + $0x40] sm:$0xff]
    %v103 = vld [vmem:[#allocation4 + $0x48] sm:$0xff]
    %v104 = vld [vmem:[#allocation4 + $0x50] sm:$0xff]
    %v105 = vld [vmem:[#allocation4 + $0x58] sm:$0xff]
    %v106 = vld [vmem:[#allocation4 + $0x60] sm:$0xff]
    %v107 = vld [vmem:[#allocation4 + $0x68] sm:$0xff]
    %v108 = vld [vmem:[#allocation4 + $0x70] sm:$0xff]
    %v109 = vld [vmem:[#allocation4 + $0x78] sm:$0xff]
    %v110 = vld [vmem:[%s4] sm:$0x1]
    %v112 = vperm.slane %v110, 0
    %114 = vmatpush.msra.mxu0 %v109
    %115 = vmatpush.msra.mxu0 %v108
    %116 = vmatpush.msra.mxu0 %v107
    %117 = vmatpush.msra.mxu0 %v106
    %118 = vmatpush.msra.mxu0 %v105
    %119 = vmatpush.msra.mxu0 %v104
    %120 = vmatpush.msra.mxu0 %v103
    %121 = vmatpush.msra.mxu0 %v102
    %122 = vmatpush.msra.mxu0 %v101
    %123 = vmatpush.msra.mxu0 %v100
    %124 = vmatpush.msra.mxu0 %v99
    %125 = vmatpush.msra.mxu0 %v98
    %126 = vmatpush.msra.mxu0 %v97
    %127 = vmatpush.msra.mxu0 %v96
    %128 = vmatpush.msra.mxu0 %v95
    %129 = vmatpush.msra.mxu0 %v94
    %130 = vmatmul.f32.gmra.mxu0 %v93
    %v131 = vpop.f32.mrf.mxu0
    %v132 = vadd.f32 %v112, %v131
    %133 = vdwg.mxu0
    %134 = vst [vmem:[%s5] sm:$0xff] %v132
    // Predicated region
    $region30: #{forward.1} parent=1 // pred_check
      _
    $region31: #{forward.1} parent=1 // pred_check_branch
      %136 = sbr.rel (0) target = $region33
    $region32: #{forward.1} parent=1 // pred_region
      _
    $region33: #{forward.1} parent=1 // pred_fallthru
      _
    // Predicated region
    $region34: #{forward.1} parent=1 // pred_check
      _
    $region35: #{forward.1} parent=1 // pred_check_branch
      %138 = sbr.rel (0) target = $region37
    $region36: #{forward.1} parent=1 // pred_region
      _
    $region37: #{forward.1} parent=1 // pred_fallthru
      _
    %139 = vsyncpa [#allocation3], 1
    %140 = vsyncpa [#allocation5], 1

</llo_original>
